<compile_context>
chip_gen: v7x
topology: tpu7x:2x2x1
jax: 0.10.0
libtpu: 0.0.40
codegen_flags: <defaults>
</compile_context>

<pallas_src>
import jax
import jax.numpy as jnp
from jax.experimental import pallas as pl
from jax.experimental.pallas import tpu as pltpu


def _round_up(x: int, m: int) -> int:
    return ((x + m - 1) // m) * m


def _vmem_budget_bytes() -> int:
    """~75% of physical VMEM (48 MiB on v7x, ~96 MiB on v5e/v6e), capped at 100 MiB."""
    cap = 64 * 2 ** 20  # conservative fallback (v7x physical size)
    try:
        cap = int(pltpu.get_tpu_info().vmem_capacity_bytes)
    except Exception:
        pass
    return max(32 * 2 ** 20, min(int(0.75 * cap), 100 * 2 ** 20))


def _projection_kernel(x_ref, w1_ref, b1_ref, w2_ref, b2_ref, o_ref):
    # Linear 1 on the MXU, fp32 accumulation, fp32 bias add.
    h = jnp.dot(x_ref[...], w1_ref[...], preferred_element_type=jnp.float32) + b1_ref[...]
    # LeakyReLU (PyTorch default negative_slope = 0.01), fp32 on the VPU.
    h = jnp.where(h > 0, h, 0.01 * h)
    # Linear 2 on the MXU.  Casting h to the weight dtype (bf16 path) halves the LHS
    # vmatmul pushes; accumulation stays fp32 (documented extra rounding vs. fp32 path).
    w2 = w2_ref[...]
    y = jnp.dot(h.astype(w2.dtype), w2, preferred_element_type=jnp.float32) + b2_ref[...]
    # Output activation: Tanh on the EUP; cast only at the final (lane-dense) store.
    o_ref[...] = jnp.tanh(y).astype(o_ref.dtype)


def projection_n(x, w1, b1, w2, b2, *, tile_b=8192,
                 matmul_dtype=jnp.bfloat16, out_dtype=None):
    """Fused forward of ProjectionN.

    x : (B, latent_dim)
    w1: (latent_dim, hidden_dim)   (transposed from PyTorch's (out, in))
    b1: (hidden_dim,) or (1, hidden_dim)
    w2: (hidden_dim, latent_dim)
    b2: (latent_dim,) or (1, latent_dim)
    tile_b      : target batch rows per grid step (footprint-checked against VMEM).
    matmul_dtype: dtype for x/W1/W2 on the MXU (default bf16; use jnp.float32 for
                  full precision).  Biases, accumulation and activations stay fp32.
    out_dtype   : output dtype (default: x.dtype; bf16 halves the write stream).
    """
    B, latent_dim = x.shape
    hidden_dim = w1.shape[1]
    out_dtype = x.dtype if out_dtype is None else out_dtype
    matmul_dtype = jnp.dtype(x.dtype if matmul_dtype is None else matmul_dtype)

    # ---- Block-diagonal folding factor: make the x/out lane dim exactly 128.
    fold = 128 // latent_dim if (latent_dim < 128 and 128 % latent_dim == 0) else 1
    lane_w = fold * latent_dim
    hid_w = fold * hidden_dim

    # ---- Fold weights/biases (tiny one-time cost; exact — kron with the identity).
    if fold > 1:
        eye = jnp.eye(fold, dtype=w1.dtype)
        w1f = jnp.kron(eye, w1)                       # (lane_w, hid_w)
        w2f = jnp.kron(eye, w2)                       # (hid_w, lane_w)
        b1f = jnp.tile(b1.reshape(1, -1), (1, fold))  # (1, hid_w)
        b2f = jnp.tile(b2.reshape(1, -1), (1, fold))  # (1, lane_w)
    else:
        w1f, w2f = w1, w2
        b1f, b2f = b1.reshape(1, -1), b2.reshape(1, -1)
    w1f = w1f.astype(matmul_dtype)
    w2f = w2f.astype(matmul_dtype)
    b1f = b1f.astype(jnp.float32)
    b2f = b2f.astype(jnp.float32)

    # Reduced-precision MXU inputs (callers that repeatedly stream the same x should
    # store it in matmul_dtype upfront to also save this cast pass).
    x = x.astype(matmul_dtype)

    x_item = jnp.dtype(matmul_dtype).itemsize
    out_item = jnp.dtype(out_dtype).itemsize
    min_row = 16 if x_item < 4 else 8  # sublane granularity (bf16 packs 16 rows/vreg)

    # ---- Pad B only as far as folding / the minimum tile needs (tiny batches only);
    # ragged grid tails are handled by Pallas block masking (rows are independent).
    b_need = _round_up(B, fold)
    if b_need < fold * min_row:
        b_need = fold * min_row
    if b_need != B:
        x = jnp.pad(x, ((0, b_need - B), (0, 0)))
    Bf = b_need // fold
    x = x.reshape(Bf, lane_w)  # pure row-major reshape: zero HBM data movement

    # ---- VMEM budget & batch-tile size (physical, lane/sublane padded estimate).
    vmem_cap = _vmem_budget_bytes()
    lane_pad = _round_up(lane_w, 128)
    hid_pad = _round_up(hid_w, 128)
    w_bytes = (_round_up(lane_w, min_row) * hid_pad
               + _round_up(hid_w, min_row) * lane_pad) * x_item
    b_bytes = 8 * (hid_pad + lane_pad) * 4
    param_bytes = 2 * (w_bytes + b_bytes)  # constant-index params still double-buffer
    # double-buffered x/out streaming tiles + ~3 fp32-wide intermediates (h, cast, y)
    bytes_per_row = 2 * lane_pad * (x_item + out_item) + 3 * hid_pad * 4
    budget = max(bytes_per_row * min_row, vmem_cap - param_bytes - (4 << 20))
    vmem_rows = max(min_row, int(budget / (1.5 * bytes_per_row)))

    tile_req = max(min_row, (max(1, int(tile_b)) + fold - 1) // fold)  # folded rows
    tile_bf = min(tile_req, vmem_rows)
    if Bf <= 2 * min_row:
        tile_bf = Bf  # single block == full array dims (always a legal block shape)
    else:
        # Keep grid length >= 2: v7x megacore sharding + x/out DMA/compute overlap.
        tile_bf = min(tile_bf, _round_up(pl.cdiv(Bf, 2), min_row))
        tile_bf = max(min_row, (tile_bf // min_row) * min_row)
    grid = (pl.cdiv(Bf, tile_bf),)

    out = pl.pallas_call(
        _projection_kernel,
        out_shape=jax.ShapeDtypeStruct((Bf, lane_w), out_dtype),
        grid_spec=pltpu.PrefetchScalarGridSpec(
            num_scalar_prefetch=0,
            grid=grid,
            in_specs=[
                # x streams along the batch grid axis (lane-dense 128-wide blocks).
                pl.BlockSpec((tile_bf, lane_w), lambda i: (i, 0)),
                # Folded weights / biases: constant index -> VMEM-resident all steps.
                pl.BlockSpec(w1f.shape, lambda i: (0, 0)),
                pl.BlockSpec(b1f.shape, lambda i: (0, 0)),
                pl.BlockSpec(w2f.shape, lambda i: (0, 0)),
                pl.BlockSpec(b2f.shape, lambda i: (0, 0)),
            ],
            out_specs=pl.BlockSpec((tile_bf, lane_w), lambda i: (i, 0)),
        ),
        compiler_params=pltpu.CompilerParams(
            dimension_semantics=("parallel",),   # megacore sharding on v7x
            vmem_limit_bytes=int(vmem_cap),
        ),
    )(x, w1f, b1f, w2f, b2f)

    out = out.reshape(b_need, latent_dim)
    return out[:B] if b_need != B else out


def init_params(key, latent_dim, hidden_dim):
    """Deterministic init mimicking PyTorch nn.Linear defaults
    (uniform(-1/sqrt(fan_in), 1/sqrt(fan_in)) for weights and biases)."""
    k1, k2, k3, k4 = jax.random.split(key, 4)
    bound1 = 1.0 / jnp.sqrt(latent_dim)
    bound2 = 1.0 / jnp.sqrt(hidden_dim)
    # Stored as (in, out) so the kernel computes x @ W + b.
    w1 = jax.random.uniform(k1, (latent_dim, hidden_dim), jnp.float32, -bound1, bound1)
    b1 = jax.random.uniform(k2, (1, hidden_dim), jnp.float32, -bound1, bound1)
    w2 = jax.random.uniform(k3, (hidden_dim, latent_dim), jnp.float32, -bound2, bound2)
    b2 = jax.random.uniform(k4, (1, latent_dim), jnp.float32, -bound2, bound2)
    return w1, b1, w2, b2


def reference_forward(x, w1, b1, w2, b2):
    h = x @ w1 + b1
    h = jnp.where(h > 0, h, 0.01 * h)
    y = h @ w2 + b2
    return jnp.tanh(y)


if __name__ == "__main__":
    key = jax.random.PRNGKey(0)
    kx, kp = jax.random.split(key)

    batch = 8
    latent_dim = 32
    hidden_dim = 64

    x = jax.random.normal(kx, (batch, latent_dim), jnp.float32)
    w1, b1, w2, b2 = init_params(kp, latent_dim, hidden_dim)
    ref = reference_forward(x, w1, b1, w2, b2)

    # Full-precision MXU path (tight tolerance vs. fp32 reference).
    out = jax.block_until_ready(projection_n(x, w1, b1, w2, b2, matmul_dtype=jnp.float32))
    assert out.shape == (batch, latent_dim)
    assert jnp.allclose(out, ref, atol=1e-4, rtol=1e-4), "fp32 mismatch vs reference"

    # Default bf16 MXU path + ragged batch (B % fold != 0 exercises the minimal pad).
    batch2 = 13
    x2 = jax.random.normal(jax.random.PRNGKey(1), (batch2, latent_dim), jnp.float32)
    out2 = jax.block_until_ready(projection_n(x2, w1, b1, w2, b2))
    ref2 = reference_forward(x2, w1, b1, w2, b2)
    assert out2.shape == (batch2, latent_dim)
    assert jnp.allclose(out2, ref2, atol=3e-2, rtol=3e-2), "bf16 mismatch vs reference"

    # Multi-step grid with a partial tail block (grid >= 2, no wrapper-side padding).
    batch3 = 1000
    x3 = jax.random.normal(jax.random.PRNGKey(2), (batch3, latent_dim), jnp.float32)
    out3 = jax.block_until_ready(
        projection_n(x3, w1, b1, w2, b2, tile_b=512, matmul_dtype=jnp.float32))
    ref3 = reference_forward(x3, w1, b1, w2, b2)
    assert out3.shape == (batch3, latent_dim)
    assert jnp.allclose(out3, ref3, atol=1e-4, rtol=1e-4), "tiled fp32 mismatch vs reference"

    print("KERNEL_OK")
</pallas_src>

<mosaic_0001>
module attributes {stable_mosaic.version = 11 : i64} {
  func.func @_projection_kernel(%arg0: i32, %arg1: memref<8x128xf32, #tpu.memory_space<vmem>>, %arg2: memref<128x256xf32, #tpu.memory_space<vmem>>, %arg3: memref<1x256xf32, #tpu.memory_space<vmem>>, %arg4: memref<256x128xf32, #tpu.memory_space<vmem>>, %arg5: memref<1x128xf32, #tpu.memory_space<vmem>>, %arg6: memref<8x128xf32, #tpu.memory_space<vmem>>) attributes {dimension_semantics = [#tpu.dimension_semantics<parallel>], iteration_bounds = array<i64: 1>, scalar_prefetch = 0 : i64, scratch_operands = 0 : i64, tpu.core_type = #tpu.core_type<tc>, window_params = [{transform_indices = @transform_0, window_bounds = array<i64: 8, 128>}, {pipeline_mode = #tpu.pipeline_mode<synchronous>, transform_indices = @transform_1, window_bounds = array<i64: 128, 256>}, {pipeline_mode = #tpu.pipeline_mode<synchronous>, transform_indices = @transform_2, window_bounds = array<i64: 1, 256>}, {pipeline_mode = #tpu.pipeline_mode<synchronous>, transform_indices = @transform_3, window_bounds = array<i64: 256, 128>}, {pipeline_mode = #tpu.pipeline_mode<synchronous>, transform_indices = @transform_4, window_bounds = array<i64: 1, 128>}, {transform_indices = @transform_5, window_bounds = array<i64: 8, 128>}]} {
    %c0 = arith.constant 0 : index
    %c0_0 = arith.constant 0 : index
    %0 = vector.load %arg1[%c0, %c0_0] : memref<8x128xf32, #tpu.memory_space<vmem>>, vector<8x128xf32>
    %c0_1 = arith.constant 0 : index
    %c0_2 = arith.constant 0 : index
    %1 = vector.load %arg2[%c0_1, %c0_2] : memref<128x256xf32, #tpu.memory_space<vmem>>, vector<128x256xf32>
    %cst = arith.constant dense<0.000000e+00> : vector<8x256xf32>
    %2 = tpu.matmul %0, %1, %cst {dimension_numbers = #tpu.dot_dimension_numbers<[1], [0], [0], [1], [0, 0, 1, 1], [], []>} : vector<8x128xf32>, vector<128x256xf32>, vector<8x256xf32> -> vector<8x256xf32>
    %c0_3 = arith.constant 0 : index
    %c0_4 = arith.constant 0 : index
    %3 = vector.load %arg3[%c0_3, %c0_4] : memref<1x256xf32, #tpu.memory_space<vmem>>, vector<1x256xf32>
    %4 = vector.broadcast %3 : vector<1x256xf32> to vector<8x256xf32>
    %5 = arith.addf %2, %4 : vector<8x256xf32>
    %cst_5 = arith.constant 0.000000e+00 : f32
    %6 = vector.broadcast %cst_5 : f32 to vector<8x256xf32>
    %7 = arith.cmpf ogt, %5, %6 : vector<8x256xf32>
    %cst_6 = arith.constant 0.00999999977 : f32
    %8 = vector.broadcast %cst_6 : f32 to vector<8x256xf32>
    %9 = arith.mulf %8, %5 : vector<8x256xf32>
    %10 = arith.select %7, %5, %9 : vector<8x256xi1>, vector<8x256xf32>
    %c0_7 = arith.constant 0 : index
    %c0_8 = arith.constant 0 : index
    %11 = vector.load %arg4[%c0_7, %c0_8] : memref<256x128xf32, #tpu.memory_space<vmem>>, vector<256x128xf32>
    %cst_9 = arith.constant dense<0.000000e+00> : vector<8x128xf32>
    %12 = tpu.matmul %10, %11, %cst_9 {dimension_numbers = #tpu.dot_dimension_numbers<[1], [0], [0], [1], [0, 0, 1, 1], [], []>} : vector<8x256xf32>, vector<256x128xf32>, vector<8x128xf32> -> vector<8x128xf32>
    %c0_10 = arith.constant 0 : index
    %c0_11 = arith.constant 0 : index
    %13 = vector.load %arg5[%c0_10, %c0_11] : memref<1x128xf32, #tpu.memory_space<vmem>>, vector<1x128xf32>
    %14 = vector.broadcast %13 : vector<1x128xf32> to vector<8x128xf32>
    %15 = arith.addf %12, %14 : vector<8x128xf32>
    %16 = math.tanh %15 : vector<8x128xf32>
    %c0_12 = arith.constant 0 : index
    %c0_13 = arith.constant 0 : index
    %17 = vector.load %arg6[%c0_12, %c0_13] : memref<8x128xf32, #tpu.memory_space<vmem>>, vector<8x128xf32>
    tpu.vector_store %arg6[%c0_12, %c0_13], %16 {strides = array<i32>} : memref<8x128xf32, #tpu.memory_space<vmem>>, vector<8x128xf32>,
    return
  }
  func.func @transform_0(%arg0: i32) -> (i32, i32) {
    %c0_i32 = arith.constant 0 : i32
    %c0_i32_0 = arith.constant 0 : i32
    return %arg0, %c0_i32 : i32, i32
  }
  func.func @transform_1(%arg0: i32) -> (i32, i32) {
    %c0_i32 = arith.constant 0 : i32
    %c0_i32_0 = arith.constant 0 : i32
    %c0_i32_1 = arith.constant 0 : i32
    return %c0_i32, %c0_i32_0 : i32, i32
  }
  func.func @transform_2(%arg0: i32) -> (i32, i32) {
    %c0_i32 = arith.constant 0 : i32
    %c0_i32_0 = arith.constant 0 : i32
    %c0_i32_1 = arith.constant 0 : i32
    return %c0_i32, %c0_i32_0 : i32, i32
  }
  func.func @transform_3(%arg0: i32) -> (i32, i32) {
    %c0_i32 = arith.constant 0 : i32
    %c0_i32_0 = arith.constant 0 : i32
    %c0_i32_1 = arith.constant 0 : i32
    return %c0_i32, %c0_i32_0 : i32, i32
  }
  func.func @transform_4(%arg0: i32) -> (i32, i32) {
    %c0_i32 = arith.constant 0 : i32
    %c0_i32_0 = arith.constant 0 : i32
    %c0_i32_1 = arith.constant 0 : i32
    return %c0_i32, %c0_i32_0 : i32, i32
  }
  func.func @transform_5(%arg0: i32) -> (i32, i32) {
    %c0_i32 = arith.constant 0 : i32
    %c0_i32_0 = arith.constant 0 : i32
    return %arg0, %c0_i32 : i32, i32
  }
}

</mosaic_0001>

<llo_original>
// kernel: tpu_custom_call.1
$region0: #{tpu_custom_call.1}
  #allocation0 [shape = 'u32[]', space=smem, size = 0x4, offset = 0x4, fixed_abs, tag = 'smem constant byte address 0x4 - core index']
  #allocation1 [shape = 'u32[144,128]{1,0:T(1,128)}', space=vmem, size = 0x12000, scoped, tag = 'internal scratch']
  %s0 = inlined_call_operand.hbm [shape: f32[8,128], index: 0, kind: input, shape index: {}]
  %s1 = inlined_call_operand.hbm [shape: f32[128,256], index: 1, kind: input, shape index: {}]
  %s2 = inlined_call_operand.vmem [shape: f32[1,256], index: 2, kind: input, shape index: {}]
  %s3 = inlined_call_operand.hbm [shape: f32[256,128], index: 3, kind: input, shape index: {}]
  %s4 = inlined_call_operand.vmem [shape: f32[1,128], index: 4, kind: input, shape index: {}]
  %s5 = inlined_call_operand.hbm [shape: f32[8,128], index: 5, kind: output, shape index: {}]
  %s6 = sld [smem:[#allocation0]]
  $region42: #{tpu_custom_call.1} parent=0
    _
  %s8 = ssub.s32 1, %s6
  %s9 = scalar_select 0, %s8, %s6
  $region1: #{tpu_custom_call.1} parent=0
    #allocation2 [shape = 'u8[4096]{0}', space=vmem, size = 0x1000, scoped, tag = 'input window, operand 0, single buffered']
    #allocation3 [shape = 's32[1]{0}', space=sflag, size = 0x4, scoped, tag = 'scoped memory for tpu_custom_call.1']
    #allocation4 [shape = 's32[1]{0}', space=sflag, size = 0x4, scoped, tag = 'scoped memory for tpu_custom_call.1']
    #allocation5 [shape = 'u8[131072]{0}', space=vmem, size = 0x20000, scoped, tag = 'input window, operand 1, single buffered']
    #allocation6 [shape = 's32[1]{0}', space=sflag, size = 0x4, scoped, tag = 'scoped memory for tpu_custom_call.1']
    #allocation7 [shape = 'u8[131072]{0}', space=vmem, size = 0x20000, scoped, tag = 'input window, operand 3, single buffered']
    #allocation8 [shape = 'u8[4096]{0}', space=vmem, size = 0x1000, scoped, tag = 'output window, operand 0, single buffered']
    %10 = vsyncpa [#allocation3], 0
    %11 = vsyncpa [#allocation6], 0
    %12 = vsyncpa [#allocation4], 0
    // Predicated region
    $region2: #{tpu_custom_call.1} parent=1 // pred_check
      _
    $region3: #{tpu_custom_call.1} parent=1 // pred_check_branch
      %14 = sbr.rel (0) target = $region5
    $region4: #{tpu_custom_call.1} parent=1 // pred_region
      %s16 = ssub.s32 128, 128
      %17 = vsyncadd [#allocation3], %s16
      %s19 = sshll.u32 [#allocation2], 4
      %s20 = int_to_ptr.vmem [resolvable:$true] %s19
      %22 = dma.hbm_to_vmem [thread:$0]  %s0, 128, %s20, [#allocation3]
    $region5: #{tpu_custom_call.1} parent=1 // pred_fallthru
      _
    // Predicated region
    $region6: #{tpu_custom_call.1} parent=1 // pred_check
      _
    $region7: #{tpu_custom_call.1} parent=1 // pred_check_branch
      %24 = sbr.rel (0) target = $region9
    $region8: #{tpu_custom_call.1} parent=1 // pred_region
      %s26 = ssub.s32 4096, 4096
      %27 = vsyncadd [#allocation6], %s26
      %s28 = sshll.u32 [#allocation5], 4
      %s29 = int_to_ptr.vmem [resolvable:$true] %s28
      %34 = dma.hbm_to_vmem [thread:$0]  %s1, 4096, %s29, [#allocation6], 256, 256, 16
    $region9: #{tpu_custom_call.1} parent=1 // pred_fallthru
      _
    // Predicated region
    $region10: #{tpu_custom_call.1} parent=1 // pred_check
      _
    $region11: #{tpu_custom_call.1} parent=1 // pred_check_branch
      %36 = sbr.rel (0) target = $region13
    $region12: #{tpu_custom_call.1} parent=1 // pred_region
      _
    $region13: #{tpu_custom_call.1} parent=1 // pred_fallthru
      _
    // Predicated region
    $region14: #{tpu_custom_call.1} parent=1 // pred_check
      _
    $region15: #{tpu_custom_call.1} parent=1 // pred_check_branch
      %38 = sbr.rel (0) target = $region17
    $region16: #{tpu_custom_call.1} parent=1 // pred_region
      %s40 = ssub.s32 4096, 4096
      %41 = vsyncadd [#allocation6], %s40
      %s42 = sshll.u32 [#allocation7], 4
      %s43 = int_to_ptr.vmem [resolvable:$true] %s42
      %48 = dma.hbm_to_vmem [thread:$0]  %s3, 4096, %s43, [#allocation6], 128, 128, 8
    $region17: #{tpu_custom_call.1} parent=1 // pred_fallthru
      _
    // Predicated region
    $region18: #{tpu_custom_call.1} parent=1 // pred_check
      _
    $region19: #{tpu_custom_call.1} parent=1 // pred_check_branch
      %50 = sbr.rel (0) target = $region21
    $region20: #{tpu_custom_call.1} parent=1 // pred_region
      _
    $region21: #{tpu_custom_call.1} parent=1 // pred_fallthru
      _
    // Predicated region
    $region22: #{tpu_custom_call.1} parent=1 // pred_check
      _
    $region23: #{tpu_custom_call.1} parent=1 // pred_check_branch
      %52 = sbr.rel (0) target = $region25
    $region24: #{tpu_custom_call.1} parent=1 // pred_region
      %53 = dma.done [#allocation3], 128
    $region25: #{tpu_custom_call.1} parent=1 // pred_fallthru
      _
    // Predicated region
    $region26: #{tpu_custom_call.1} parent=1 // pred_check
      _
    $region27: #{tpu_custom_call.1} parent=1 // pred_check_branch
      %55 = sbr.rel (0) target = $region29
    $region28: #{tpu_custom_call.1} parent=1 // pred_region
      %56 = dma.done [#allocation6], 4096
    $region29: #{tpu_custom_call.1} parent=1 // pred_fallthru
      _
    // Predicated region
    $region30: #{tpu_custom_call.1} parent=1 // pred_check
      _
    $region31: #{tpu_custom_call.1} parent=1 // pred_check_branch
      %58 = sbr.rel (0) target = $region33
    $region32: #{tpu_custom_call.1} parent=1 // pred_region
      %59 = dma.done [#allocation6], 4096
    $region33: #{tpu_custom_call.1} parent=1 // pred_fallthru
      _
    %v60 = vld [vmem:[#allocation2] sm:$0xff]
    %v61 = vld [vmem:[#allocation5] sm:$0xff]
    %v62 = vld [vmem:[#allocation5 + $0x8] sm:$0xff]
    %v63 = vld [vmem:[#allocation5 + $0x10] sm:$0xff]
    %v64 = vld [vmem:[#allocation5 + $0x18] sm:$0xff]
    %v65 = vld [vmem:[#allocation5 + $0x20] sm:$0xff]
    %v66 = vld [vmem:[#allocation5 + $0x28] sm:$0xff]
    %v67 = vld [vmem:[#allocation5 + $0x30] sm:$0xff]
    %v68 = vld [vmem:[#allocation5 + $0x38] sm:$0xff]
    %v69 = vld [vmem:[#allocation5 + $0x40] sm:$0xff]
    %v70 = vld [vmem:[#allocation5 + $0x48] sm:$0xff]
    %v71 = vld [vmem:[#allocation5 + $0x50] sm:$0xff]
    %v72 = vld [vmem:[#allocation5 + $0x58] sm:$0xff]
    %v73 = vld [vmem:[#allocation5 + $0x60] sm:$0xff]
    %v74 = vld [vmem:[#allocation5 + $0x68] sm:$0xff]
    %v75 = vld [vmem:[#allocation5 + $0x70] sm:$0xff]
    %v76 = vld [vmem:[#allocation5 + $0x78] sm:$0xff]
    %v77 = vld [vmem:[#allocation5 + $0x80] sm:$0xff]
    %v78 = vld [vmem:[#allocation5 + $0x88] sm:$0xff]
    %v79 = vld [vmem:[#allocation5 + $0x90] sm:$0xff]
    %v80 = vld [vmem:[#allocation5 + $0x98] sm:$0xff]
    %v81 = vld [vmem:[#allocation5 + $0xa0] sm:$0xff]
    %v82 = vld [vmem:[#allocation5 + $0xa8] sm:$0xff]
    %v83 = vld [vmem:[#allocation5 + $0xb0] sm:$0xff]
    %v84 = vld [vmem:[#allocation5 + $0xb8] sm:$0xff]
    %v85 = vld [vmem:[#allocation5 + $0xc0] sm:$0xff]
    %v86 = vld [vmem:[#allocation5 + $0xc8] sm:$0xff]
    %v87 = vld [vmem:[#allocation5 + $0xd0] sm:$0xff]
    %v88 = vld [vmem:[#allocation5 + $0xd8] sm:$0xff]
    %v89 = vld [vmem:[#allocation5 + $0xe0] sm:$0xff]
    %v90 = vld [vmem:[#allocation5 + $0xe8] sm:$0xff]
    %v91 = vld [vmem:[#allocation5 + $0xf0] sm:$0xff]
    %v92 = vld [vmem:[#allocation5 + $0xf8] sm:$0xff]
    %v93 = vld [vmem:[%s2] sm:$0x3]
    %v95 = vlaneseq
    %v96 = vshrl.u32 %v95, 7
    %v97 = vsub.s32 0, %v96
    %v98 = vrot.slane %v93, %v97
    %v99 = vlaneseq
    %v100 = vshrl.u32 %v99, 7
    %v101 = vsub.s32 1, %v100
    %v102 = vrot.slane %v93, %v101
    %105 = vmatprep.subr.mxu0 %v62
    %106 = vmatpush1.msra.mxu0 %v61
    %107 = vmatprep.subr.mxu0 %v64
    %108 = vmatpush1.msra.mxu0 %v63
    %109 = vmatprep.subr.mxu0 %v66
    %110 = vmatpush1.msra.mxu0 %v65
    %111 = vmatprep.subr.mxu0 %v68
    %112 = vmatpush1.msra.mxu0 %v67
    %113 = vmatprep.subr.mxu0 %v70
    %114 = vmatpush1.msra.mxu0 %v69
    %115 = vmatprep.subr.mxu0 %v72
    %116 = vmatpush1.msra.mxu0 %v71
    %117 = vmatprep.subr.mxu0 %v74
    %118 = vmatpush1.msra.mxu0 %v73
    %119 = vmatprep.subr.mxu0 %v76
    %120 = vmatpush1.msra.mxu0 %v75
    %121 = vmatprep.subr.mxu0 %v78
    %122 = vmatpush1.msra.mxu0 %v77
    %123 = vmatprep.subr.mxu0 %v80
    %124 = vmatpush1.msra.mxu0 %v79
    %125 = vmatprep.subr.mxu0 %v82
    %126 = vmatpush1.msra.mxu0 %v81
    %127 = vmatprep.subr.mxu0 %v84
    %128 = vmatpush1.msra.mxu0 %v83
    %129 = vmatprep.subr.mxu0 %v86
    %130 = vmatpush1.msra.mxu0 %v85
    %131 = vmatprep.subr.mxu0 %v88
    %132 = vmatpush1.msra.mxu0 %v87
    %133 = vmatprep.subr.mxu0 %v90
    %134 = vmatpush1.msra.mxu0 %v89
    %135 = vmatprep.subr.mxu0 %v92
    %136 = vmatpush1.msra.mxu0 %v91
    %137 = vmatprep.subr.mxu0 0.0
    %138 = vmatpush1.msra.mxu0 0.0
    %139 = vmatprep.subr.mxu0 0.0
    %140 = vmatpush1.msra.mxu0 0.0
    %141 = vmatprep.subr.mxu0 0.0
    %142 = vmatpush1.msra.mxu0 0.0
    %143 = vmatprep.subr.mxu0 0.0
    %144 = vmatpush1.msra.mxu0 0.0
    %145 = vmatprep.subr.mxu0 0.0
    %146 = vmatpush1.msra.mxu0 0.0
    %147 = vmatprep.subr.mxu0 0.0
    %148 = vmatpush1.msra.mxu0 0.0
    %149 = vmatprep.subr.mxu0 0.0
    %150 = vmatpush1.msra.mxu0 0.0
    %151 = vmatprep.subr.mxu0 0.0
    %152 = vmatpush1.msra.mxu0 0.0
    %153 = vmatprep.subr.mxu0 0.0
    %154 = vmatpush1.msra.mxu0 0.0
    %155 = vmatprep.subr.mxu0 0.0
    %156 = vmatpush1.msra.mxu0 0.0
    %157 = vmatprep.subr.mxu0 0.0
    %158 = vmatpush1.msra.mxu0 0.0
    %159 = vmatprep.subr.mxu0 0.0
    %160 = vmatpush1.msra.mxu0 0.0
    %161 = vmatprep.subr.mxu0 0.0
    %162 = vmatpush1.msra.mxu0 0.0
    %163 = vmatprep.subr.mxu0 0.0
    %164 = vmatpush1.msra.mxu0 0.0
    %165 = vmatprep.subr.mxu0 0.0
    %166 = vmatpush1.msra.mxu0 0.0
    %167 = vmatprep.subr.mxu0 0.0
    %168 = vmatpush1.msra.mxu0 0.0
    %169 = vmatprep.mubr.f32.mxu0 0.0
    %170 = vmatmul.mubr.f32.gmra.mrb[0].mxu0 %v60
    %v171 = vpop.f32.mrb[0].mxu0
    %v172 = vadd.f32 %v98, %v171
    %v173 = vpop.f32.mrb[0].mxu0
    %v174 = vadd.f32 %v102, %v173
    %175 = vdwg.mxu0
    %vm176 = vcmp.gt.f32.partialorder %v172, 0.0
    %vm177 = vcmp.gt.f32.partialorder %v174, 0.0
    %v178 = vmul.f32 %v172, 0.01
    %v179 = vmul.f32 %v174, 0.01
    %v180 = vsel %vm176, %v172, %v178
    %v181 = vsel %vm177, %v174, %v179
    %v182 = vld [vmem:[#allocation7] sm:$0xff]
    %v183 = vld [vmem:[#allocation7 + $0x8] sm:$0xff]
    %v184 = vld [vmem:[#allocation7 + $0x10] sm:$0xff]
    %v185 = vld [vmem:[#allocation7 + $0x18] sm:$0xff]
    %v186 = vld [vmem:[#allocation7 + $0x20] sm:$0xff]
    %v187 = vld [vmem:[#allocation7 + $0x28] sm:$0xff]
    %v188 = vld [vmem:[#allocation7 + $0x30] sm:$0xff]
    %v189 = vld [vmem:[#allocation7 + $0x38] sm:$0xff]
    %v190 = vld [vmem:[#allocation7 + $0x40] sm:$0xff]
    %v191 = vld [vmem:[#allocation7 + $0x48] sm:$0xff]
    %v192 = vld [vmem:[#allocation7 + $0x50] sm:$0xff]
    %v193 = vld [vmem:[#allocation7 + $0x58] sm:$0xff]
    %v194 = vld [vmem:[#allocation7 + $0x60] sm:$0xff]
    %v195 = vld [vmem:[#allocation7 + $0x68] sm:$0xff]
    %v196 = vld [vmem:[#allocation7 + $0x70] sm:$0xff]
    %v197 = vld [vmem:[#allocation7 + $0x78] sm:$0xff]
    %v198 = vld [vmem:[#allocation7 + $0x80] sm:$0xff]
    %v199 = vld [vmem:[#allocation7 + $0x88] sm:$0xff]
    %v200 = vld [vmem:[#allocation7 + $0x90] sm:$0xff]
    %v201 = vld [vmem:[#allocation7 + $0x98] sm:$0xff]
    %v202 = vld [vmem:[#allocation7 + $0xa0] sm:$0xff]
    %v203 = vld [vmem:[#allocation7 + $0xa8] sm:$0xff]
    %v204 = vld [vmem:[#allocation7 + $0xb0] sm:$0xff]
    %v205 = vld [vmem:[#allocation7 + $0xb8] sm:$0xff]
    %v206 = vld [vmem:[#allocation7 + $0xc0] sm:$0xff]
    %v207 = vld [vmem:[#allocation7 + $0xc8] sm:$0xff]
    %v208 = vld [vmem:[#allocation7 + $0xd0] sm:$0xff]
    %v209 = vld [vmem:[#allocation7 + $0xd8] sm:$0xff]
    %v210 = vld [vmem:[#allocation7 + $0xe0] sm:$0xff]
    %v211 = vld [vmem:[#allocation7 + $0xe8] sm:$0xff]
    %v212 = vld [vmem:[#allocation7 + $0xf0] sm:$0xff]
    %v213 = vld [vmem:[#allocation7 + $0xf8] sm:$0xff]
    %v214 = vld [vmem:[%s4] sm:$0x1]
    %v216 = vlaneseq
    %v217 = vshrl.u32 %v216, 7
    %v218 = vsub.s32 0, %v217
    %v219 = vrot.slane %v214, %v218
    %221 = vmatprep.subr.mxu0 0.0
    %222 = vmatpush1.msra.mxu0 %v182
    %223 = vmatprep.subr.mxu0 0.0
    %224 = vmatpush1.msra.mxu0 %v183
    %225 = vmatprep.subr.mxu0 0.0
    %226 = vmatpush1.msra.mxu0 %v184
    %227 = vmatprep.subr.mxu0 0.0
    %228 = vmatpush1.msra.mxu0 %v185
    %229 = vmatprep.subr.mxu0 0.0
    %230 = vmatpush1.msra.mxu0 %v186
    %231 = vmatprep.subr.mxu0 0.0
    %232 = vmatpush1.msra.mxu0 %v187
    %233 = vmatprep.subr.mxu0 0.0
    %234 = vmatpush1.msra.mxu0 %v188
    %235 = vmatprep.subr.mxu0 0.0
    %236 = vmatpush1.msra.mxu0 %v189
    %237 = vmatprep.subr.mxu0 0.0
    %238 = vmatpush1.msra.mxu0 %v190
    %239 = vmatprep.subr.mxu0 0.0
    %240 = vmatpush1.msra.mxu0 %v191
    %241 = vmatprep.subr.mxu0 0.0
    %242 = vmatpush1.msra.mxu0 %v192
    %243 = vmatprep.subr.mxu0 0.0
    %244 = vmatpush1.msra.mxu0 %v193
    %245 = vmatprep.subr.mxu0 0.0
    %246 = vmatpush1.msra.mxu0 %v194
    %247 = vmatprep.subr.mxu0 0.0
    %248 = vmatpush1.msra.mxu0 %v195
    %249 = vmatprep.subr.mxu0 0.0
    %250 = vmatpush1.msra.mxu0 %v196
    %251 = vmatprep.subr.mxu0 0.0
    %252 = vmatpush1.msra.mxu0 %v197
    %253 = vmatprep.subr.mxu0 0.0
    %254 = vmatpush1.msra.mxu0 %v198
    %255 = vmatprep.subr.mxu0 0.0
    %256 = vmatpush1.msra.mxu0 %v199
    %257 = vmatprep.subr.mxu0 0.0
    %258 = vmatpush1.msra.mxu0 %v200
    %259 = vmatprep.subr.mxu0 0.0
    %260 = vmatpush1.msra.mxu0 %v201
    %261 = vmatprep.subr.mxu0 0.0
    %262 = vmatpush1.msra.mxu0 %v202
    %263 = vmatprep.subr.mxu0 0.0
    %264 = vmatpush1.msra.mxu0 %v203
    %265 = vmatprep.subr.mxu0 0.0
    %266 = vmatpush1.msra.mxu0 %v204
    %267 = vmatprep.subr.mxu0 0.0
    %268 = vmatpush1.msra.mxu0 %v205
    %269 = vmatprep.subr.mxu0 0.0
    %270 = vmatpush1.msra.mxu0 %v206
    %271 = vmatprep.subr.mxu0 0.0
    %272 = vmatpush1.msra.mxu0 %v207
    %273 = vmatprep.subr.mxu0 0.0
    %274 = vmatpush1.msra.mxu0 %v208
    %275 = vmatprep.subr.mxu0 0.0
    %276 = vmatpush1.msra.mxu0 %v209
    %277 = vmatprep.subr.mxu0 0.0
    %278 = vmatpush1.msra.mxu0 %v210
    %279 = vmatprep.subr.mxu0 0.0
    %280 = vmatpush1.msra.mxu0 %v211
    %281 = vmatprep.subr.mxu0 0.0
    %282 = vmatpush1.msra.mxu0 %v212
    %283 = vmatprep.subr.mxu0 0.0
    %284 = vmatpush1.msra.mxu0 %v213
    %285 = vmatprep.mubr.f32.mxu0 %v181
    %286 = vmatmul.mubr.f32.gmra.mrb[0].mxu0 %v180
    %v287 = vpop.f32.mrb[0].mxu0
    %v288 = vadd.f32 %v219, %v287
    %v289 = vpop.f32.mrb[0].mxu0
    %290 = vdwg.mxu0
    %v291 = vtanh.pop %v288
    %292 = vst [vmem:[#allocation8] sm:$0xff] %v291
    // Predicated region
    $region34: #{tpu_custom_call.1} parent=1 // pred_check
      _
    $region35: #{tpu_custom_call.1} parent=1 // pred_check_branch
      %294 = sbr.rel (0) target = $region37
    $region36: #{tpu_custom_call.1} parent=1 // pred_region
      %s296 = ssub.s32 128, 128
      %297 = vsyncadd [#allocation4], %s296
      %s299 = sshll.u32 [#allocation8], 4
      %s300 = int_to_ptr.vmem [resolvable:$true] %s299
      %302 = dma.vmem_to_hbm [thread:$0]  %s300, 128, %s5, [#allocation4]
    $region37: #{tpu_custom_call.1} parent=1 // pred_fallthru
      _
    // Predicated region
    $region38: #{tpu_custom_call.1} parent=1 // pred_check
      _
    $region39: #{tpu_custom_call.1} parent=1 // pred_check_branch
      %304 = sbr.rel (0) target = $region41
    $region40: #{tpu_custom_call.1} parent=1 // pred_region
      %305 = dma.done [#allocation4], 128
    $region41: #{tpu_custom_call.1} parent=1 // pred_fallthru
      _
    %306 = vsyncpa [#allocation3], 1
    %307 = vsyncpa [#allocation6], 1
    %308 = vsyncpa [#allocation4], 1

</llo_original>
